<compile_context>
chip_gen: v7x
topology: tpu7x:2x2x1
jax: 0.10.0
libtpu: 0.0.40
codegen_flags: <defaults>
</compile_context>

<pallas_src>
import functools

import jax
import jax.numpy as jnp
from jax.experimental import pallas as pl
from jax.experimental.pallas import tpu as pltpu


def _round_up(x, m):
    return ((x + m - 1) // m) * m


def _cdiv(a, b):
    return -(-a // b)


def _linear_kernel(x_ref, w_ref, b_ref, o_ref, acc_ref):
    """One (batch-tile, K-tile) step of y = x @ W.T + b.

    x_ref  : (TB, TK)  VMEM   effective-row tile of x
    w_ref  : (KO, TK)  VMEM   (block-diagonal replicated) weight, resident
    b_ref  : (1,)      SMEM   bias (f32 scalar)
    o_ref  : (KO, TB)  VMEM   lane-dense output slab (TB multiple of 128)
    acc_ref: (KO, TB)  VMEM   f32 accumulator across the K grid axis
    """
    kk = pl.program_id(1)

    @pl.when(kk == 0)
    def _():
        acc_ref[...] = jnp.zeros_like(acc_ref)

    acc_ref[...] += jax.lax.dot_general(
        w_ref[...], x_ref[...],
        dimension_numbers=(((1,), (1,)), ((), ())),   # contract on TK -> (KO, TB)
        preferred_element_type=jnp.float32,           # f32 accumulation
    )

    @pl.when(kk == pl.num_programs(1) - 1)
    def _():
        o_ref[...] = (acc_ref[...] + b_ref[0]).astype(o_ref.dtype)


@functools.partial(jax.jit, static_argnames=("tb", "tk", "force_pallas"))
def linear_regression_forward(x, weight, bias, *, tb=None, tk=None,
                              force_pallas=False):
    """y = x @ weight.T + bias with weight (1, D), bias (1,). Returns (B, 1)."""
    B, D = x.shape
    assert weight.shape == (1, D)
    out_dtype = jnp.result_type(x.dtype, weight.dtype)
    itemsize = jnp.dtype(x.dtype).itemsize

    # ---- small-input fast path ---------------------------------------------
    # pallas_call launch + DMA setup dominates tiny problems; fused XLA is faster.
    if (B * D * itemsize < (2 << 20)) and not force_pallas:
        y = jnp.dot(x, weight.T, preferred_element_type=jnp.float32,
                    precision=jax.lax.Precision.HIGHEST)
        return (y + bias.astype(jnp.float32)).astype(out_dtype)

    # ---- small-D packing: (B, D) -> (B/k, 128) with k = 128/D ---------------
    if D < 128 and 128 % D == 0:
        k_out = 128 // D
    else:
        k_out = 1
    d_eff = k_out * D
    b_eff_total = _cdiv(B, k_out)          # effective rows before padding

    # ---- K tiling: only when one 128-row full-D tile already exceeds the
    #      per-buffer VMEM budget (very large D, relevant on v7x's 64 MiB VMEM) --
    VMEM_BUF_BYTES = 8 << 20               # target bytes per (double-buffered) x buffer
    if tk is not None:
        tk_eff = min(max(128, (tk // 128) * 128), _round_up(d_eff, 128))
    elif 128 * _round_up(d_eff, 128) * itemsize > VMEM_BUF_BYTES:
        tk_eff = max(128, (VMEM_BUF_BYTES // (128 * itemsize)) // 128 * 128)
    else:
        tk_eff = d_eff

    if tk_eff >= d_eff:
        tk_eff = d_eff                     # single full-dim K block, no padding
        d_eff_pad = d_eff
        num_k = 1
    else:
        # TODO(synk): K-tiled path zero-pads D to a multiple of tk_eff with a
        # wrapper-side copy; a ragged last K block would avoid that copy.
        d_eff_pad = _round_up(d_eff, tk_eff)
        num_k = d_eff_pad // tk_eff

    # ---- batch tile: default to the VMEM cap (padded bytes), split/target by
    #      *actual* HBM bytes per step ----------------------------------------
    padded_row_bytes = _round_up(tk_eff, 128) * itemsize    # VMEM per effective row
    actual_row_bytes = min(tk_eff, d_eff) * itemsize        # HBM  per effective row
    vmem_rows = max(128, (VMEM_BUF_BYTES // padded_row_bytes) // 128 * 128)

    tb_rows = vmem_rows if tb is None else max(128, (tb // 128) * 128)
    tb_rows = min(tb_rows, vmem_rows)

    # Megacore (v7x): aim for >= 4 batch tiles so both TensorCores get work, but
    # never shrink a step below ~2 MiB of real HBM traffic.
    split_rows = _round_up(_cdiv(b_eff_total, 4), 128)
    min_step_rows = _round_up(_cdiv(2 << 20, actual_row_bytes), 128)
    if split_rows >= min_step_rows:
        tb_rows = min(tb_rows, split_rows)

    tb_rows = max(128, min(tb_rows, _round_up(b_eff_total, 128)))

    # ---- pad / reshape inputs ------------------------------------------------
    B_pad = _round_up(B, tb_rows * k_out)
    if B_pad != B:
        x = jnp.pad(x, ((0, B_pad - B), (0, 0)))    # padded rows sliced off below
    b_eff = B_pad // k_out
    num_b = b_eff // tb_rows

    x_eff = x.reshape(b_eff, d_eff)                 # zero-copy for row-major x
    if d_eff_pad != d_eff:
        x_eff = jnp.pad(x_eff, ((0, 0), (0, d_eff_pad - d_eff)))

    w_flat = weight.reshape(-1)
    if k_out > 1:
        # Block-diagonal replicated weight: row j holds w at columns j*D:(j+1)*D.
        eye = jnp.eye(k_out, dtype=weight.dtype)
        w_eff = (eye[:, :, None] * w_flat[None, None, :]).reshape(k_out, d_eff)
    else:
        w_eff = weight.reshape(1, d_eff)
    if d_eff_pad != d_eff:
        w_eff = jnp.pad(w_eff, ((0, 0), (0, d_eff_pad - d_eff)))

    bias_smem = bias.reshape(1).astype(jnp.float32)

    # ---- explicit VMEM budget: sized from actual buffers, comfortably inside
    #      v5e/v6e (128 MiB) and v7x (64 MiB) physical VMEM ---------------------
    w_itemsize = jnp.dtype(weight.dtype).itemsize
    out_itemsize = jnp.dtype(out_dtype).itemsize
    x_buf = tb_rows * _round_up(tk_eff, 128) * itemsize
    w_buf = _round_up(k_out, 8) * _round_up(tk_eff, 128) * w_itemsize
    o_buf = _round_up(k_out, 8) * tb_rows * out_itemsize
    acc_buf = _round_up(k_out, 8) * tb_rows * 4
    vmem_limit = 2 * (x_buf + w_buf + o_buf) + acc_buf + (4 << 20)
    vmem_limit = int(min(max(vmem_limit, 32 << 20), 56 << 20))

    out = pl.pallas_call(
        _linear_kernel,
        out_shape=jax.ShapeDtypeStruct((k_out, b_eff), out_dtype),
        grid=(num_b, num_k),
        in_specs=[
            pl.BlockSpec((tb_rows, tk_eff), lambda i, j: (i, j)),    # x tiles
            pl.BlockSpec((k_out, tk_eff), lambda i, j: (0, j)),      # weight
            pl.BlockSpec(memory_space=pltpu.MemorySpace.SMEM),       # bias scalar
        ],
        out_specs=pl.BlockSpec((k_out, tb_rows), lambda i, j: (0, i)),
        scratch_shapes=[pltpu.VMEM((k_out, tb_rows), jnp.float32)],
        compiler_params=pltpu.CompilerParams(
            dimension_semantics=("parallel", "arbitrary"),           # megacore on v7x
            vmem_limit_bytes=vmem_limit,
        ),
    )(x_eff, w_eff, bias_smem)

    # Undo the packing: out[j, r] = y[r*k_out + j]; back to nn.Linear's (B, 1).
    return out.T.reshape(B_pad)[:B].reshape(B, 1)


if __name__ == "__main__":
    key = jax.random.PRNGKey(0)
    kx, kw, kb = jax.random.split(key, 3)

    def make_params(in_size):
        # Deterministic params mimicking nn.Linear's uniform(-1/sqrt(D), 1/sqrt(D))
        bound = 1.0 / jnp.sqrt(jnp.float32(in_size))
        w = jax.random.uniform(kw, (1, in_size), minval=-bound, maxval=bound,
                               dtype=jnp.float32)
        b = jax.random.uniform(kb, (1,), minval=-bound, maxval=bound,
                               dtype=jnp.float32)
        return w, b

    def check(y, x, w, b):
        y_ref = jnp.dot(x, w.T, precision=jax.lax.Precision.HIGHEST) + b
        assert y.shape == (x.shape[0], 1)
        assert jnp.allclose(y, y_ref, atol=1e-4, rtol=1e-4), "mismatch vs reference"

    # Case 1: packed small-D path (D=32 -> k=4), multiple batch tiles.
    w, b = make_params(32)
    x = jax.random.normal(kx, (1024, 32), dtype=jnp.float32)
    y = jax.block_until_ready(
        linear_regression_forward(x, w, b, tb=128, force_pallas=True))
    check(y, x, w, b)

    # Case 2: packed path with a ragged batch (padding sliced off by the wrapper).
    x2 = jax.random.normal(kx, (200, 32), dtype=jnp.float32)
    y2 = jax.block_until_ready(
        linear_regression_forward(x2, w, b, tb=128, force_pallas=True))
    check(y2, x2, w, b)

    # Case 3: standard path, D a multiple of 128, 4 batch tiles.
    w3, b3 = make_params(256)
    x3 = jax.random.normal(kx, (512, 256), dtype=jnp.float32)
    y3 = jax.block_until_ready(
        linear_regression_forward(x3, w3, b3, tb=128, force_pallas=True))
    check(y3, x3, w3, b3)

    # Case 4: standard path with D neither a divisor nor a multiple of 128.
    w4, b4 = make_params(48)
    x4 = jax.random.normal(kx, (256, 48), dtype=jnp.float32)
    y4 = jax.block_until_ready(
        linear_regression_forward(x4, w4, b4, tb=128, force_pallas=True))
    check(y4, x4, w4, b4)

    # Case 5: K-tiled accumulator path (tk forced small to exercise it).
    y5 = jax.block_until_ready(
        linear_regression_forward(x3, w3, b3, tb=128, tk=128, force_pallas=True))
    check(y5, x3, w3, b3)

    # Case 6: module default inSize=1 (packed k=128).
    w6, b6 = make_params(1)
    x6 = jax.random.normal(kx, (300, 1), dtype=jnp.float32)
    y6 = jax.block_until_ready(
        linear_regression_forward(x6, w6, b6, force_pallas=True))
    check(y6, x6, w6, b6)

    # Case 7: small-input fast path (skips pallas_call, fused XLA dot).
    x7 = jax.random.normal(kx, (64, 32), dtype=jnp.float32)
    y7 = jax.block_until_ready(linear_regression_forward(x7, w, b))
    check(y7, x7, w, b)

    print("KERNEL_OK")
</pallas_src>

<mosaic_0001>
module attributes {stable_mosaic.version = 11 : i64} {
  func.func @_linear_kernel(%arg0: i32, %arg1: i32, %arg2: memref<128x128xf32, #tpu.memory_space<vmem>>, %arg3: memref<4x128xf32, #tpu.memory_space<vmem>>, %arg4: memref<1xf32, #tpu.memory_space<smem>>, %arg5: memref<4x128xf32, #tpu.memory_space<vmem>>, %arg6: memref<4x128xf32, #tpu.memory_space<vmem>>) attributes {dimension_semantics = [#tpu.dimension_semantics<parallel>, #tpu.dimension_semantics<arbitrary>], iteration_bounds = array<i64: 2, 1>, scalar_prefetch = 0 : i64, scratch_operands = 1 : i64, tpu.core_type = #tpu.core_type<tc>, window_params = [{transform_indices = @transform_0, window_bounds = array<i64: 128, 128>}, {transform_indices = @transform_1, window_bounds = array<i64: 4, 128>}, {transform_indices = @transform_2, window_bounds = array<i64: 1>}, {transform_indices = @transform_3, window_bounds = array<i64: 4, 128>}]} {
    %c0_i32 = arith.constant 0 : i32
    %0 = arith.cmpi eq, %arg1, %c0_i32 : i32
    %1 = arith.extui %0 : i1 to i32
    %c0_i32_0 = arith.constant 0 : i32
    %2 = arith.cmpi ne, %1, %c0_i32_0 : i32
    scf.if %2 {
      %cst_10 = arith.constant 0.000000e+00 : f32
      %12 = vector.broadcast %cst_10 : f32 to vector<4x128xf32>
      %c0_11 = arith.constant 0 : index
      %c0_12 = arith.constant 0 : index
      %13 = vector.load %arg6[%c0_11, %c0_12] : memref<4x128xf32, #tpu.memory_space<vmem>>, vector<4x128xf32>
      tpu.vector_store %arg6[%c0_11, %c0_12], %12 {strides = array<i32>} : memref<4x128xf32, #tpu.memory_space<vmem>>, vector<4x128xf32>,
    } else {
    }
    %c0 = arith.constant 0 : index
    %c0_1 = arith.constant 0 : index
    %3 = vector.load %arg6[%c0, %c0_1] : memref<4x128xf32, #tpu.memory_space<vmem>>, vector<4x128xf32>
    %c0_2 = arith.constant 0 : index
    %c0_3 = arith.constant 0 : index
    %4 = vector.load %arg3[%c0_2, %c0_3] : memref<4x128xf32, #tpu.memory_space<vmem>>, vector<4x128xf32>
    %c0_4 = arith.constant 0 : index
    %c0_5 = arith.constant 0 : index
    %5 = vector.load %arg2[%c0_4, %c0_5] : memref<128x128xf32, #tpu.memory_space<vmem>>, vector<128x128xf32>
    %cst = arith.constant dense<0.000000e+00> : vector<4x128xf32>
    %6 = tpu.matmul %4, %5, %cst {dimension_numbers = #tpu.dot_dimension_numbers<[1], [1], [0], [0], [0, 0, 1, 0], [], []>} : vector<4x128xf32>, vector<128x128xf32>, vector<4x128xf32> -> vector<4x128xf32>
    %7 = arith.addf %3, %6 : vector<4x128xf32>
    %c0_6 = arith.constant 0 : index
    %c0_7 = arith.constant 0 : index
    %8 = vector.load %arg6[%c0_6, %c0_7] : memref<4x128xf32, #tpu.memory_space<vmem>>, vector<4x128xf32>
    tpu.vector_store %arg6[%c0_6, %c0_7], %7 {strides = array<i32>} : memref<4x128xf32, #tpu.memory_space<vmem>>, vector<4x128xf32>,
    %c0_i32_8 = arith.constant 0 : i32
    %9 = arith.cmpi eq, %arg1, %c0_i32_8 : i32
    %10 = arith.extui %9 : i1 to i32
    %c0_i32_9 = arith.constant 0 : i32
    %11 = arith.cmpi ne, %10, %c0_i32_9 : i32
    scf.if %11 {
      %c0_10 = arith.constant 0 : index
      %c0_11 = arith.constant 0 : index
      %12 = vector.load %arg6[%c0_10, %c0_11] : memref<4x128xf32, #tpu.memory_space<vmem>>, vector<4x128xf32>
      %c0_12 = arith.constant 0 : index
      %13 = memref.load %arg4[%c0_12] : memref<1xf32, #tpu.memory_space<smem>>
      %14 = vector.broadcast %13 : f32 to vector<4x128xf32>
      %15 = arith.addf %12, %14 : vector<4x128xf32>
      %c0_13 = arith.constant 0 : index
      %c0_14 = arith.constant 0 : index
      %16 = vector.load %arg5[%c0_13, %c0_14] : memref<4x128xf32, #tpu.memory_space<vmem>>, vector<4x128xf32>
      tpu.vector_store %arg5[%c0_13, %c0_14], %15 {strides = array<i32>} : memref<4x128xf32, #tpu.memory_space<vmem>>, vector<4x128xf32>,
    } else {
    }
    return
  }
  func.func @transform_0(%arg0: i32, %arg1: i32) -> (i32, i32) {
    %c0_i32 = arith.constant 0 : i32
    return %arg0, %arg1 : i32, i32
  }
  func.func @transform_1(%arg0: i32, %arg1: i32) -> (i32, i32) {
    %c0_i32 = arith.constant 0 : i32
    %c0_i32_0 = arith.constant 0 : i32
    return %c0_i32, %arg1 : i32, i32
  }
  func.func @transform_2(%arg0: i32, %arg1: i32) -> i32 {
    %c0_i32 = arith.constant 0 : i32
    %c0_i32_0 = arith.constant 0 : i32
    return %c0_i32 : i32
  }
  func.func @transform_3(%arg0: i32, %arg1: i32) -> (i32, i32) {
    %c0_i32 = arith.constant 0 : i32
    %c0_i32_0 = arith.constant 0 : i32
    return %c0_i32, %arg0 : i32, i32
  }
}

</mosaic_0001>

<llo_original>
// kernel: linear_regression_forward.1
$region0: #{linear_regression_forward.1}
  #allocation0 [shape = 'u32[]', space=smem, size = 0x4, offset = 0x4, fixed_abs, tag = 'smem constant byte address 0x4 - core index']
  #allocation1 [shape = 'u32[144,128]{1,0:T(1,128)}', space=vmem, size = 0x12000, scoped, tag = 'internal scratch']
  #allocation2 [shape = 'f32[4,128]{1,0:T(4,128)}', space=vmem, size = 0x800, scoped, tag = 'scratch operand']
  #allocation3 [shape = 'f32[1]{0:T(128)S(6)}', space=smem, size = 0x200, scoped, tag = 'scoped memory for linear_regression_forward.1']
  %s0 = inlined_call_operand.vmem [shape: f32[256,128], index: 0, kind: input, shape index: {}]
  %s1 = inlined_call_operand.vmem [shape: f32[4,128], index: 1, kind: input, shape index: {}]
  %s2 = inlined_call_operand.<no memory space> [shape: f32[1], index: 2, kind: input, shape index: {}]
  %s3 = inlined_call_operand.vmem [shape: f32[4,256], index: 3, kind: output, shape index: {}]
  %s4 = sld [smem:[#allocation0]]
  $region53: #{linear_regression_forward.1} parent=0
    _
  %s6 = ssub.s32 1, %s4
  %s7 = scalar_select 0, %s6, %s4
  %8 = sst [smem:[#allocation3]] %s2
  loop: start=0, step=1, limit=4
  $region2: #{linear_regression_forward.1} parent=0 // loop_pre_header
    _
  $region3: #{linear_regression_forward.1} parent=0 // loop_header
    %s10 = sphi 0, %s14
    %p11 = scmp.ge.s32.totalorder %s10, 4
    %s17 = sphi 0, %s29
    %s18 = sphi 0, %s25
    %s19 = sphi 0, %s17
    %s20 = sphi 0, %s18
    %s21 = sphi 0, %s19
    %s22 = sphi 0, %s20
    %s34 = sphi 0, %s36
    %s37 = sphi 0, %s34
    %s38 = sphi 0, %s37
    %s54 = sphi 0, %s38
    %s60 = sphi 0, %s62
    %s63 = sphi 0, %s60
    %s64 = sphi 0, %s63
    %s80 = sphi 0, %s64
    %s84 = sphi 0, %s84
    %s86 = sphi 0, %s84
    %s87 = sphi 0, %s86
    %s101 = sphi 0, %s87
    %s107 = sphi 0, %s109
    %s110 = sphi 0, %s107
    %s111 = sphi 0, %s110
    %s127 = sphi 0, %s111
  $region4: #{linear_regression_forward.1} parent=0 // loop_header_branch
    %13 = sbr.rel (%p11) target = $region8
  $region5: #{linear_regression_forward.1} parent=0 // loop_body
    %s15 = ssub.s32 %s10, 1
    %s16 = ssub.s32 %s10, 2
    %s23 = sadd.s32 1, %s18
    %p24 = scmp.ge.s32.totalorder %s23, 1
    %s25 = scalar_select %p24, 0, %s23
    %s26 = sadd.s32 1, %s17
    %s27 = scalar_select %p24, %s26, %s17
    %p28 = scmp.ge.s32.totalorder %s27, 2
    %s29 = scalar_select %p28, 0, %s27
    %s30 = ssub.s32 %s17, %s29
    %s31 = ssub.s32 %s18, %s25
    %s32 = sor.u32 %s30, %s31
    %p33 = scmp.eq.s32.totalorder %s32, 0
    %s35 = sadd.s32 %s34, 1
    %s36 = scalar_select %p33, %s34, %s35
    %p39 = pneg %p33
    %p40 = scmp.eq.s32.totalorder %s10, 1
    %p41 = por %p39, %p40
    %p42 = scmp.ne.s32.totalorder %s34, %s37
    %p43 = scmp.eq.s32.totalorder %s10, 0
    %p44 = por %p42, %p43
    %p45 = scmp.ne.s32.totalorder %s34, %s37
    %p46 = scmp.eq.s32.totalorder %s15, 1
    %p47 = por %p45, %p46
    %p48 = scmp.ne.s32.totalorder %s37, %s38
    %p49 = scmp.eq.s32.totalorder %s15, 0
    %p50 = por %p48, %p49
    %p51 = scmp.ne.s32.totalorder %s37, %s38
    %p52 = scmp.eq.s32.totalorder %s16, 1
    %p53 = por %p51, %p52
    %p55 = scmp.ne.s32.totalorder %s38, %s54
    %p56 = scmp.eq.s32.totalorder %s16, 0
    %p57 = por %p55, %p56
    %s58 = ssub.s32 %s18, %s25
    %p59 = scmp.eq.s32.totalorder %s58, 0
    %s61 = sadd.s32 %s60, 1
    %s62 = scalar_select %p59, %s60, %s61
    %p65 = pneg %p59
    %p66 = scmp.eq.s32.totalorder %s10, 1
    %p67 = por %p65, %p66
    %p68 = scmp.ne.s32.totalorder %s60, %s63
    %p69 = scmp.eq.s32.totalorder %s10, 0
    %p70 = por %p68, %p69
    %p71 = scmp.ne.s32.totalorder %s60, %s63
    %p72 = scmp.eq.s32.totalorder %s15, 1
    %p73 = por %p71, %p72
    %p74 = scmp.ne.s32.totalorder %s63, %s64
    %p75 = scmp.eq.s32.totalorder %s15, 0
    %p76 = por %p74, %p75
    %p77 = scmp.ne.s32.totalorder %s63, %s64
    %p78 = scmp.eq.s32.totalorder %s16, 1
    %p79 = por %p77, %p78
    %p81 = scmp.ne.s32.totalorder %s64, %s80
    %p82 = scmp.eq.s32.totalorder %s16, 0
    %p83 = por %p81, %p82
    %s85 = sadd.s32 %s84, 1
    %p88 = scmp.eq.s32.totalorder %s10, 1
    %p89 = scmp.ne.s32.totalorder %s84, %s86
    %p90 = scmp.eq.s32.totalorder %s10, 0
    %p91 = por %p89, %p90
    %p92 = scmp.ne.s32.totalorder %s84, %s86
    %p93 = scmp.eq.s32.totalorder %s15, 1
    %p94 = por %p92, %p93
    %p95 = scmp.ne.s32.totalorder %s86, %s87
    %p96 = scmp.eq.s32.totalorder %s15, 0
    %p97 = por %p95, %p96
    %p98 = scmp.ne.s32.totalorder %s86, %s87
    %p99 = scmp.eq.s32.totalorder %s16, 1
    %p100 = por %p98, %p99
    %p102 = scmp.ne.s32.totalorder %s87, %s101
    %p103 = scmp.eq.s32.totalorder %s16, 0
    %p104 = por %p102, %p103
    %s105 = ssub.s32 %s17, %s29
    %p106 = scmp.eq.s32.totalorder %s105, 0
    %s108 = sadd.s32 %s107, 1
    %s109 = scalar_select %p106, %s107, %s108
    %p112 = pneg %p106
    %p113 = scmp.eq.s32.totalorder %s10, 1
    %p114 = por %p112, %p113
    %p115 = scmp.ne.s32.totalorder %s107, %s110
    %p116 = scmp.eq.s32.totalorder %s10, 0
    %p117 = por %p115, %p116
    %p118 = scmp.ne.s32.totalorder %s107, %s110
    %p119 = scmp.eq.s32.totalorder %s15, 1
    %p120 = por %p118, %p119
    %p121 = scmp.ne.s32.totalorder %s110, %s111
    %p122 = scmp.eq.s32.totalorder %s15, 0
    %p123 = por %p121, %p122
    %p124 = scmp.ne.s32.totalorder %s110, %s111
    %p125 = scmp.eq.s32.totalorder %s16, 1
    %p126 = por %p124, %p125
    %p128 = scmp.ne.s32.totalorder %s111, %s127
    %p129 = scmp.eq.s32.totalorder %s16, 0
    %p130 = por %p128, %p129
    %p131 = scmp.le.s32.totalorder 1, %s10
    %p132 = scmp.lt.s32.totalorder %s10, 3
    %p133 = pnand %p131, %p132
    %p134 = pneg %p133
    // Predicated region
    $region9: #{linear_regression_forward.1} parent=5 // pred_check
      _
    $region10: #{linear_regression_forward.1} parent=5 // pred_check_branch
      %136 = sbr.rel (%p133) target = $region12
    $region11: #{linear_regression_forward.1} parent=5 // pred_region
      %s137 = ssub.s32 %s10, 1
      // Predicated region
      $region13: #{linear_regression_forward.1} parent=11 // pred_check
        %p138 = pneg %p76
      $region14: #{linear_regression_forward.1} parent=11 // pred_check_branch
        %140 = sbr.rel (%p138) target = $region16
      $region15: #{linear_regression_forward.1} parent=11 // pred_region
        %p141 = scmp.lt.s32.totalorder %s20, 0
        %s142 = scalar_select %p141, %s20, 0
        %s143 = smul.addr %s142, 4
        %s144 = scalar_lea.vmem %s1, %s143
      $region16: #{linear_regression_forward.1} parent=11 // pred_fallthru
        _
      // Predicated region
      $region17: #{linear_regression_forward.1} parent=11 // pred_check
        %p145 = pneg %p97
      $region18: #{linear_regression_forward.1} parent=11 // pred_check_branch
        %147 = sbr.rel (%p145) target = $region20
      $region19: #{linear_regression_forward.1} parent=11 // pred_region
        _
      $region20: #{linear_regression_forward.1} parent=11 // pred_fallthru
        _
    $region12: #{linear_regression_forward.1} parent=5 // pred_fallthru
      _
    %p148 = scmp.lt.s32.totalorder %s10, 2
    // Predicated region
    $region21: #{linear_regression_forward.1} parent=5 // pred_check
      %p149 = pneg %p148
    $region22: #{linear_regression_forward.1} parent=5 // pred_check_branch
      %151 = sbr.rel (%p149) target = $region24
    $region23: #{linear_regression_forward.1} parent=5 // pred_region
      // Predicated region
      $region25: #{linear_regression_forward.1} parent=23 // pred_check
        %p152 = pneg %p44
      $region26: #{linear_regression_forward.1} parent=23 // pred_check_branch
        %154 = sbr.rel (%p152) target = $region28
      $region27: #{linear_regression_forward.1} parent=23 // pred_region
        %s155 = smul.u32 16, %s17
        %p156 = scmp.lt.s32.totalorder %s155, 31
        %s157 = scalar_select %p156, %s155, 31
        %p158 = scmp.lt.s32.totalorder %s18, 0
        %s159 = scalar_select %p158, %s18, 0
        %s160 = sadd.s32 %s159, %s157
        %s161 = smul.addr %s160, 8
        %s162 = scalar_lea.vmem %s0, %s161
        %s163 = smul.u32 16, %s17
      $region28: #{linear_regression_forward.1} parent=23 // pred_fallthru
        _
    $region24: #{linear_regression_forward.1} parent=5 // pred_fallthru
      _
    %p164 = scmp.le.s32.totalorder 1, %s10
    %p165 = scmp.lt.s32.totalorder %s10, 3
    %p166 = pnand %p164, %p165
    %p167 = pneg %p166
    // Predicated region
    $region29: #{linear_regression_forward.1} parent=5 // pred_check
      _
    $region30: #{linear_regression_forward.1} parent=5 // pred_check_branch
      %169 = sbr.rel (%p166) target = $region32
    $region31: #{linear_regression_forward.1} parent=5 // pred_region
      %s170 = ssub.s32 %s10, 1
      %s171 = smul.u32 16, %s19
      %p172 = scmp.lt.s32.totalorder %s171, 31
      %s173 = scalar_select %p172, %s171, 31
      %p174 = scmp.lt.s32.totalorder %s20, 0
      %s175 = scalar_select %p174, %s20, 0
      %s176 = sadd.s32 %s175, %s173
      %s177 = smul.addr %s176, 8
      %s178 = scalar_lea.vmem %s0, %s177
      %p179 = pneg %p50
      %p180 = pneg %p47
      %p181 = scmp.lt.s32.totalorder %s20, 0
      %s182 = scalar_select %p181, %s20, 0
      %s183 = smul.addr %s182, 4
      %s184 = scalar_lea.vmem %s1, %s183
      %p185 = pneg %p76
      %p186 = pneg %p73
      %p187 = pneg %p97
      %p188 = pneg %p94
      %p189 = pneg %p123
      %p190 = pneg %p120
      %p191 = scmp.lt.s32.totalorder %s19, 1
      %s192 = scalar_select %p191, %s19, 1
      %s193 = smul.addr %s192, 4
      %s194 = scalar_lea.vmem %s3, %s193
      %s195 = smul.u32 16, %s19
      %p196 = scmp.lt.s32.totalorder %s195, 31
      %s197 = scalar_select %p196, %s195, 31
      %p198 = scmp.lt.s32.totalorder %s20, 0
      %s199 = scalar_select %p198, %s20, 0
      %s200 = sadd.s32 %s199, %s197
      %s201 = smul.addr %s200, 8
      %s202 = scalar_lea.vmem %s0, %s201
      %s203 = smul.u32 16, %s19
      %p204 = scmp.lt.s32.totalorder %s20, 0
      %s205 = scalar_select %p204, %s20, 0
      %s206 = smul.addr %s205, 4
      %s207 = scalar_lea.vmem %s1, %s206
      %p208 = scmp.lt.s32.totalorder %s19, 1
      %s209 = scalar_select %p208, %s19, 1
      %s210 = smul.addr %s209, 4
      %s211 = scalar_lea.vmem %s3, %s210
      %p212 = scmp.eq.s32.totalorder %s20, 0
      // Predicated region
      $region33: #{linear_regression_forward.1} parent=31 // pred_check
        %p213 = pneg %p212
      $region34: #{linear_regression_forward.1} parent=31 // pred_check_branch
        %215 = sbr.rel (%p213) target = $region36
      $region35: #{linear_regression_forward.1} parent=31 // pred_region
        %216 = vst [vmem:[#allocation2] sm:$0xf] 0.0
      $region36: #{linear_regression_forward.1} parent=31 // pred_fallthru
        _
      %v217 = vld [vmem:[#allocation2] sm:$0xf]
      %v218 = vld [vmem:[%s207] sm:$0xf]
      %v219 = vld [vmem:[%s202] sm:$0xff]
      %v220 = vld [vmem:[%s202 + $0x8] sm:$0xff]
      %v221 = vld [vmem:[%s202 + $0x10] sm:$0xff]
      %v222 = vld [vmem:[%s202 + $0x18] sm:$0xff]
      %v223 = vld [vmem:[%s202 + $0x20] sm:$0xff]
      %v224 = vld [vmem:[%s202 + $0x28] sm:$0xff]
      %v225 = vld [vmem:[%s202 + $0x30] sm:$0xff]
      %v226 = vld [vmem:[%s202 + $0x38] sm:$0xff]
      %v227 = vld [vmem:[%s202 + $0x40] sm:$0xff]
      %v228 = vld [vmem:[%s202 + $0x48] sm:$0xff]
      %v229 = vld [vmem:[%s202 + $0x50] sm:$0xff]
      %v230 = vld [vmem:[%s202 + $0x58] sm:$0xff]
      %v231 = vld [vmem:[%s202 + $0x60] sm:$0xff]
      %v232 = vld [vmem:[%s202 + $0x68] sm:$0xff]
      %v233 = vld [vmem:[%s202 + $0x70] sm:$0xff]
      %v234 = vld [vmem:[%s202 + $0x78] sm:$0xff]
      %235 = vmatprep.subr.mxu0 0.0
      %236 = vmatpush1.xpose.msra.mxu0 %v219
      %237 = vmatprep.subr.mxu0 0.0
      %238 = vmatpush1.xpose.msra.mxu0 %v220
      %239 = vmatprep.subr.mxu0 0.0
      %240 = vmatpush1.xpose.msra.mxu0 %v221
      %241 = vmatprep.subr.mxu0 0.0
      %242 = vmatpush1.xpose.msra.mxu0 %v222
      %243 = vmatprep.subr.mxu0 0.0
      %244 = vmatpush1.xpose.msra.mxu0 %v223
      %245 = vmatprep.subr.mxu0 0.0
      %246 = vmatpush1.xpose.msra.mxu0 %v224
      %247 = vmatprep.subr.mxu0 0.0
      %248 = vmatpush1.xpose.msra.mxu0 %v225
      %249 = vmatprep.subr.mxu0 0.0
      %250 = vmatpush1.xpose.msra.mxu0 %v226
      %251 = vmatprep.subr.mxu0 0.0
      %252 = vmatpush1.xpose.msra.mxu0 %v227
      %253 = vmatprep.subr.mxu0 0.0
      %254 = vmatpush1.xpose.msra.mxu0 %v228
      %255 = vmatprep.subr.mxu0 0.0
      %256 = vmatpush1.xpose.msra.mxu0 %v229
      %257 = vmatprep.subr.mxu0 0.0
      %258 = vmatpush1.xpose.msra.mxu0 %v230
      %259 = vmatprep.subr.mxu0 0.0
      %260 = vmatpush1.xpose.msra.mxu0 %v231
      %261 = vmatprep.subr.mxu0 0.0
      %262 = vmatpush1.xpose.msra.mxu0 %v232
      %263 = vmatprep.subr.mxu0 0.0
      %264 = vmatpush1.xpose.msra.mxu0 %v233
      %265 = vmatprep.subr.mxu0 0.0
      %266 = vmatpush1.xpose.msra.mxu0 %v234
      %267 = vmatprep.subr.mxu0 0.0
      %268 = vmatpush1.xpose.msra.mxu0 0.0
      %269 = vmatprep.subr.mxu0 0.0
      %270 = vmatpush1.xpose.msra.mxu0 0.0
      %271 = vmatprep.subr.mxu0 0.0
      %272 = vmatpush1.xpose.msra.mxu0 0.0
      %273 = vmatprep.subr.mxu0 0.0
      %274 = vmatpush1.xpose.msra.mxu0 0.0
      %275 = vmatprep.subr.mxu0 0.0
      %276 = vmatpush1.xpose.msra.mxu0 0.0
      %277 = vmatprep.subr.mxu0 0.0
      %278 = vmatpush1.xpose.msra.mxu0 0.0
      %279 = vmatprep.subr.mxu0 0.0
      %280 = vmatpush1.xpose.msra.mxu0 0.0
      %281 = vmatprep.subr.mxu0 0.0
      %282 = vmatpush1.xpose.msra.mxu0 0.0
      %283 = vmatprep.subr.mxu0 0.0
      %284 = vmatpush1.xpose.msra.mxu0 0.0
      %285 = vmatprep.subr.mxu0 0.0
      %286 = vmatpush1.xpose.msra.mxu0 0.0
      %287 = vmatprep.subr.mxu0 0.0
      %288 = vmatpush1.xpose.msra.mxu0 0.0
      %289 = vmatprep.subr.mxu0 0.0
      %290 = vmatpush1.xpose.msra.mxu0 0.0
      %291 = vmatprep.subr.mxu0 0.0
      %292 = vmatpush1.xpose.msra.mxu0 0.0
      %293 = vmatprep.subr.mxu0 0.0
      %294 = vmatpush1.xpose.msra.mxu0 0.0
      %295 = vmatprep.subr.mxu0 0.0
      %296 = vmatpush1.xpose.msra.mxu0 0.0
      %297 = vmatprep.subr.mxu0 0.0
      %298 = vmatpush1.xpose.msra.mxu0 0.0
      %299 = vmatprep.mubr.f32.mxu0 0.0
      %300 = vmatmul.mubr.f32.gmra.mrb[0].mxu0 %v218
      %v301 = vpop.f32.mrb[0].mxu0
      %v302 = vadd.f32 0.0, %v301
      %v303 = vpop.f32.mrb[0].mxu0
      %304 = vdwg.mxu0
      %v305 = vadd.f32 %v217, %v302
      %306 = vst [vmem:[#allocation2] sm:$0xf] %v305
      // Predicated region
      $region37: #{linear_regression_forward.1} parent=31 // pred_check
        %p307 = pneg %p212
      $region38: #{linear_regression_forward.1} parent=31 // pred_check_branch
        %309 = sbr.rel (%p307) target = $region40
      $region39: #{linear_regression_forward.1} parent=31 // pred_region
        %v310 = vld [vmem:[#allocation2] sm:$0xf]
        %s311 = sld [smem:[#allocation3]]
        %v312 = vstv %s311
        %v313 = vadd.f32 %v310, %v312
        %314 = vst [vmem:[%s211] sm:$0xf] %v313
      $region40: #{linear_regression_forward.1} parent=31 // pred_fallthru
        _
      %p315 = scmp.lt.s32.totalorder %s19, 1
      %s316 = scalar_select %p315, %s19, 1
      %s317 = smul.addr %s316, 4
      %s318 = scalar_lea.vmem %s3, %s317
      // Predicated region
      $region41: #{linear_regression_forward.1} parent=31 // pred_check
        %p319 = pneg %p120
      $region42: #{linear_regression_forward.1} parent=31 // pred_check_branch
        %321 = sbr.rel (%p319) target = $region44
      $region43: #{linear_regression_forward.1} parent=31 // pred_region
        _
      $region44: #{linear_regression_forward.1} parent=31 // pred_fallthru
        _
    $region32: #{linear_regression_forward.1} parent=5 // pred_fallthru
      _
    %p322 = scmp.le.s32.totalorder 2, %s10
    // Predicated region
    $region45: #{linear_regression_forward.1} parent=5 // pred_check
      %p323 = pneg %p322
    $region46: #{linear_regression_forward.1} parent=5 // pred_check_branch
      %325 = sbr.rel (%p323) target = $region48
    $region47: #{linear_regression_forward.1} parent=5 // pred_region
      %s326 = ssub.s32 %s10, 2
      // Predicated region
      $region49: #{linear_regression_forward.1} parent=47 // pred_check
        %p327 = pneg %p126
      $region50: #{linear_regression_forward.1} parent=47 // pred_check_branch
        %329 = sbr.rel (%p327) target = $region52
      $region51: #{linear_regression_forward.1} parent=47 // pred_region
        %p330 = scmp.lt.s32.totalorder %s21, 1
        %s331 = scalar_select %p330, %s21, 1
        %s332 = smul.addr %s331, 4
        %s333 = scalar_lea.vmem %s3, %s332
      $region52: #{linear_regression_forward.1} parent=47 // pred_fallthru
        _
    $region48: #{linear_regression_forward.1} parent=5 // pred_fallthru
      _
  $region6: #{linear_regression_forward.1} parent=0 // loop_footer
    %s14 = sadd.s32 1, %s10
  $region7: #{linear_regression_forward.1} parent=0 // loop_footer_branch
    %9 = sbr.rel target = $region3
  $region8: #{linear_regression_forward.1} parent=0 // loop_exit
    _

</llo_original>
